<compile_context>
chip_gen: v7x
topology: tpu7x:2x2x1
jax: 0.10.0
libtpu: 0.0.40
codegen_flags: <defaults>
</compile_context>

<pallas_src>
import jax
import jax.numpy as jnp
from jax.experimental import pallas as pl
from jax.experimental.pallas import tpu as pltpu

_EPS = 1e-6
_TINY_BYTES = 256 << 10        # below this: single-block, no grid machinery
_MAX_BLOCK_VMEM = 8 << 20      # per-buffer VMEM cap (x4 double-buffered = 32 MiB)


def _log_kernel(x_ref, o_ref):
    # Elementwise hot path: upcast to f32 in-register, log(x + 1e-6) on the
    # VPU/EUP, downcast to the output dtype (keeps bf16 at 2 B/elem over HBM).
    x = x_ref[...].astype(jnp.float32)
    o_ref[...] = jnp.log(x + _EPS).astype(o_ref.dtype)


def _choose_lane(total):
    """Largest lane width that divides `total`, preferring 128-multiples."""
    for cand in (1024, 512, 256, 128):
        if total % cand == 0:
            return cand
    # Caller guarantees total % 8 == 0 here: largest multiple-of-8 divisor.
    # A full-extent last axis < 128 is legal; masked stores beat the two
    # extra HBM passes a pad + slice-back would cost.
    for cand in range(1016, 7, -8):
        if total % cand == 0:
            return cand
    return 0


def log_transform(x, *, block_bytes=4 << 20):
    """Computes log(x + 1e-6) elementwise via a Pallas TPU kernel.

    x: any shape (NCHW in the reference use-case). Floating dtypes are
    preserved; non-float inputs are promoted to float32 (matching torch.log).
    """
    orig_shape = x.shape

    if not jnp.issubdtype(x.dtype, jnp.floating):
        x = x.astype(jnp.float32)
    dtype = x.dtype
    itemsize = jnp.dtype(dtype).itemsize
    total = x.size

    if total == 0:
        return jnp.zeros(orig_shape, dtype)

    x_flat = jnp.ravel(x)

    # Pad only in the rare case total % 8 != 0 (no multiple-of-8 lane exists).
    pad = 0 if total % 8 == 0 else (-total) % 128
    if pad:
        x_flat = jnp.pad(x_flat, (0, pad), constant_values=1.0)
    padded_total = total + pad

    lane = _choose_lane(padded_total)
    rows = padded_total // lane
    padded_lane = -(-lane // 128) * 128        # VMEM rounds lanes up to 128
    row_bytes_hbm = lane * itemsize
    row_bytes_vmem = padded_lane * itemsize

    x2d = x_flat.reshape(rows, lane)           # contiguous -> free reshape
    slab_bytes = rows * row_bytes_hbm

    if slab_bytes <= _TINY_BYTES:
        # Tiny-input fast path: single whole-array block, no grid machinery.
        out2d = pl.pallas_call(
            _log_kernel,
            out_shape=jax.ShapeDtypeStruct((rows, lane), dtype),
            in_specs=[pl.BlockSpec((rows, lane), lambda: (0, 0))],
            out_specs=pl.BlockSpec((rows, lane), lambda: (0, 0)),
        )(x2d)
    else:
        # Byte-budgeted block rows (dtype-aware), capped by per-buffer VMEM,
        # rounded to a multiple of 32 (covers f32/bf16/int8 sublane packing).
        tile_rows = min(block_bytes // row_bytes_hbm,
                        _MAX_BLOCK_VMEM // row_bytes_vmem)
        tile_rows = max(32, (tile_rows // 32) * 32)
        # Guarantee >= 2 pipelined grid steps so in/out DMAs overlap.
        half_rows = max(32, pl.cdiv(pl.cdiv(rows, 2), 32) * 32)
        tile_rows = min(tile_rows, half_rows)

        grid = (pl.cdiv(rows, tile_rows),)     # ragged last block auto-masked
        per_buf_vmem = tile_rows * row_bytes_vmem
        vmem_limit = min(48 << 20, max(32 << 20, 4 * per_buf_vmem + (8 << 20)))

        out2d = pl.pallas_call(
            _log_kernel,
            out_shape=jax.ShapeDtypeStruct((rows, lane), dtype),
            grid=grid,
            in_specs=[pl.BlockSpec((tile_rows, lane), lambda i: (i, 0))],
            out_specs=pl.BlockSpec((tile_rows, lane), lambda i: (i, 0)),
            compiler_params=pltpu.CompilerParams(
                dimension_semantics=("parallel",),   # dual-TC sharding on v7x
                vmem_limit_bytes=vmem_limit,
            ),
        )(x2d)

    out_flat = out2d.reshape(-1)
    if pad:
        out_flat = out_flat[:total]
    return out_flat.reshape(orig_shape)


if __name__ == "__main__":
    key = jax.random.PRNGKey(0)
    # Small NCHW input consistent with the module's typical use.
    x = jax.random.uniform(key, (2, 4, 16, 16), dtype=jnp.float32) + 0.1

    y = log_transform(x)
    jax.block_until_ready(y)

    y_ref = jnp.log(x + 1e-6)
    assert y.shape == x.shape and y.dtype == x.dtype
    assert jnp.allclose(y, y_ref, atol=1e-6, rtol=1e-6)

    # Gridded path with an odd shape: exact-divisor lane (no pad/slice-back).
    xl = jax.random.uniform(jax.random.PRNGKey(1), (3, 8, 131, 257),
                            dtype=jnp.float32) + 0.1
    yl = log_transform(xl, block_bytes=256 << 10)  # force multiple grid steps
    jax.block_until_ready(yl)
    assert jnp.allclose(yl, jnp.log(xl + 1e-6), atol=1e-6, rtol=1e-6)

    # bf16 dtype-preserving gridded path (lane-aligned, >=2 grid steps).
    xb = (jax.random.uniform(jax.random.PRNGKey(2), (4, 8, 64, 128),
                             dtype=jnp.float32) + 0.1).astype(jnp.bfloat16)
    yb = log_transform(xb, block_bytes=512 << 10)
    jax.block_until_ready(yb)
    assert yb.dtype == jnp.bfloat16
    assert jnp.allclose(yb.astype(jnp.float32),
                        jnp.log(xb.astype(jnp.float32) + 1e-6),
                        atol=2e-2, rtol=2e-2)

    print("KERNEL_OK")
</pallas_src>

<mosaic_0001>
module attributes {stable_mosaic.version = 11 : i64} {
  func.func @_log_kernel(%arg0: memref<2x1024xf32, #tpu.memory_space<vmem>>, %arg1: memref<2x1024xf32, #tpu.memory_space<vmem>>) attributes {dimension_semantics = [], scalar_prefetch = 0 : i64, scratch_operands = 0 : i64, tpu.core_type = #tpu.core_type<tc>} {
    %c0 = arith.constant 0 : index
    %c0_0 = arith.constant 0 : index
    %0 = vector.load %arg0[%c0, %c0_0] : memref<2x1024xf32, #tpu.memory_space<vmem>>, vector<2x1024xf32>
    %cst = arith.constant 9.99999997E-7 : f32
    %1 = vector.broadcast %cst : f32 to vector<2x1024xf32>
    %2 = arith.addf %0, %1 : vector<2x1024xf32>
    %3 = math.log %2 : vector<2x1024xf32>
    %c0_1 = arith.constant 0 : index
    %c0_2 = arith.constant 0 : index
    %4 = vector.load %arg1[%c0_1, %c0_2] : memref<2x1024xf32, #tpu.memory_space<vmem>>, vector<2x1024xf32>
    tpu.vector_store %arg1[%c0_1, %c0_2], %3 {strides = array<i32>} : memref<2x1024xf32, #tpu.memory_space<vmem>>, vector<2x1024xf32>,
    return
  }
}

</mosaic_0001>

<llo_original>
// kernel: tpu_custom_call.1
$region0: #{tpu_custom_call.1}
  #allocation0 [shape = 'u32[]', space=smem, size = 0x4, offset = 0x4, fixed_abs, tag = 'smem constant byte address 0x4 - core index']
  #allocation1 [shape = 'u32[144,128]{1,0:T(1,128)}', space=vmem, size = 0x12000, scoped, tag = 'internal scratch']
  %s0 = inlined_call_operand.hbm [shape: f32[2,1024], index: 0, kind: input, shape index: {}]
  %s1 = inlined_call_operand.hbm [shape: f32[2,1024], index: 1, kind: output, shape index: {}]
  %s2 = sld [smem:[#allocation0]]
  $region18: #{tpu_custom_call.1} parent=0
    _
  %s4 = ssub.s32 1, %s2
  %s5 = scalar_select 0, %s4, %s2
  $region1: #{tpu_custom_call.1} parent=0
    #allocation2 [shape = 'u8[8192]{0}', space=vmem, size = 0x2000, scoped, tag = 'input window, operand 0, single buffered']
    #allocation3 [shape = 's32[1]{0}', space=sflag, size = 0x4, scoped, tag = 'scoped memory for tpu_custom_call.1']
    #allocation4 [shape = 's32[1]{0}', space=sflag, size = 0x4, scoped, tag = 'scoped memory for tpu_custom_call.1']
    #allocation5 [shape = 'u8[8192]{0}', space=vmem, size = 0x2000, scoped, tag = 'output window, operand 0, single buffered']
    %6 = vsyncpa [#allocation3], 0
    %7 = vsyncpa [#allocation4], 0
    // Predicated region
    $region2: #{tpu_custom_call.1} parent=1 // pred_check
      _
    $region3: #{tpu_custom_call.1} parent=1 // pred_check_branch
      %9 = sbr.rel (0) target = $region5
    $region4: #{tpu_custom_call.1} parent=1 // pred_region
      %s11 = ssub.s32 256, 256
      %12 = vsyncadd [#allocation3], %s11
      %s14 = sshll.u32 [#allocation2], 4
      %s15 = int_to_ptr.vmem [resolvable:$true] %s14
      %17 = dma.hbm_to_vmem [thread:$0]  %s0, 256, %s15, [#allocation3]
    $region5: #{tpu_custom_call.1} parent=1 // pred_fallthru
      _
    // Predicated region
    $region6: #{tpu_custom_call.1} parent=1 // pred_check
      _
    $region7: #{tpu_custom_call.1} parent=1 // pred_check_branch
      %19 = sbr.rel (0) target = $region9
    $region8: #{tpu_custom_call.1} parent=1 // pred_region
      %20 = dma.done [#allocation3], 256
    $region9: #{tpu_custom_call.1} parent=1 // pred_fallthru
      _
    %v21 = vld [vmem:[#allocation2] sm:$0xff]
    %v22 = vld [vmem:[#allocation2 + $0x8] sm:$0xff]
    %v23 = vadd.f32 %v21, 1e-06
    %v24 = vadd.f32 %v22, 1e-06
    %v25 = vlog2.pop %v23
    %v26 = vmul.f32 %v25, 0.6931472
    %v27 = vlog2.pop %v24
    %v28 = vmul.f32 %v27, 0.6931472
    %29 = vst [vmem:[#allocation5] sm:$0xff] %v26
    %30 = vst [vmem:[#allocation5 + $0x8] sm:$0xff] %v28
    // Predicated region
    $region10: #{tpu_custom_call.1} parent=1 // pred_check
      _
    $region11: #{tpu_custom_call.1} parent=1 // pred_check_branch
      %32 = sbr.rel (0) target = $region13
    $region12: #{tpu_custom_call.1} parent=1 // pred_region
      %s34 = ssub.s32 256, 256
      %35 = vsyncadd [#allocation4], %s34
      %s37 = sshll.u32 [#allocation5], 4
      %s38 = int_to_ptr.vmem [resolvable:$true] %s37
      %40 = dma.vmem_to_hbm [thread:$0]  %s38, 256, %s1, [#allocation4]
    $region13: #{tpu_custom_call.1} parent=1 // pred_fallthru
      _
    // Predicated region
    $region14: #{tpu_custom_call.1} parent=1 // pred_check
      _
    $region15: #{tpu_custom_call.1} parent=1 // pred_check_branch
      %42 = sbr.rel (0) target = $region17
    $region16: #{tpu_custom_call.1} parent=1 // pred_region
      %43 = dma.done [#allocation4], 256
    $region17: #{tpu_custom_call.1} parent=1 // pred_fallthru
      _
    %44 = vsyncpa [#allocation3], 1
    %45 = vsyncpa [#allocation4], 1

</llo_original>
